<compile_context>
chip_gen: v6e
topology: v6e:2x2x1
jax: 0.10.0
libtpu: 0.0.40
codegen_flags: <defaults>
</compile_context>

<pallas_src>
import jax
import jax.numpy as jnp
from jax.experimental import pallas as pl
from jax.experimental.pallas import tpu as pltpu


_HID = 128           # lane-dense hidden width (all hidden layers padded to 128)
_TILE_B = 2048       # max batch-rows per tile when gridded
_MIN_TILES = 4       # aim for >=4 tiles: keeps the pipeline full, >=2 tiles/TC on v7x
_GRID_MIN_B = 1024   # below this a single grid-less block beats ~0.35us/grid-step


def _leaky_relu(x, negative_slope=0.01):
    # Single vmax per element instead of compare+select (saves a VALU op).
    return jnp.maximum(x, negative_slope * x)


def _linear_bf16(x_f32, w_bf16, b_f32):
    # Downcast activations right before the MXU dot; f32 accumulate; f32 bias add.
    return jnp.dot(x_f32.astype(jnp.bfloat16), w_bf16,
                   preferred_element_type=jnp.float32) + b_f32


def _actor_kernel(ma_ref, s_ref,
                  w1_ref, b1_ref, w2_ref, b2_ref, w3_ref, b3_ref,
                  w4_ref, b4_ref, w5_ref, b5_ref,
                  out_ref):
    max_action = ma_ref[0, 0]                      # SMEM scalar
    x = s_ref[...].astype(jnp.float32)

    x = _leaky_relu(_linear_bf16(x, w1_ref[...], b1_ref[...]))   # state_dim -> 128
    x = _leaky_relu(_linear_bf16(x, w2_ref[...], b2_ref[...]))   # 128 -> 128
    x = _leaky_relu(_linear_bf16(x, w3_ref[...], b3_ref[...]))   # 128 -> 128 (cols padded from 64)
    x = _leaky_relu(_linear_bf16(x, w4_ref[...], b4_ref[...]))   # 128 -> 128 (rows padded from 64)
    x = _linear_bf16(x, w5_ref[...], b5_ref[...])                # 128 -> action_dim (narrow)

    # Narrow store: block last dim == full array dim (action_dim), so this is a
    # cheap masked vst and avoids streaming a padded 128-wide f32 tile to HBM.
    out_ref[...] = jnp.tanh(x) * max_action


def prepare_actor_params(params, max_action):
    """One-time param prep (do NOT call per forward pass).

    - Casts weights to bf16 (halves weight DMA, native MXU rate); biases to f32.
    - Zero-pads the 64-wide l3 output to 128 lanes (w3 cols, b3) and w4 rows to
      match, so every hidden activation is lane-dense 128-wide.
    - Packs max_action as a (1,1) f32 SMEM scalar.
    """
    w3 = jnp.pad(params["w3"], ((0, 0), (0, _HID - params["w3"].shape[1])))
    b3 = jnp.pad(params["b3"], ((0, 0), (0, _HID - params["b3"].shape[1])))
    w4 = jnp.pad(params["w4"], ((0, _HID - params["w4"].shape[0]), (0, 0)))
    return {
        "w1": params["w1"].astype(jnp.bfloat16),
        "b1": params["b1"].astype(jnp.float32),
        "w2": params["w2"].astype(jnp.bfloat16),
        "b2": params["b2"].astype(jnp.float32),
        "w3": w3.astype(jnp.bfloat16),
        "b3": b3.astype(jnp.float32),
        "w4": w4.astype(jnp.bfloat16),
        "b4": params["b4"].astype(jnp.float32),
        "w5": params["w5"].astype(jnp.bfloat16),
        "b5": params["b5"].astype(jnp.float32),
        "ma": jnp.full((1, 1), float(max_action), dtype=jnp.float32),
    }


def actor_forward(state, prepped, *, use_grid=None, tile_b=None):
    """Actor MLP forward pass in one Pallas call.

    state:   (B, state_dim) float32
    prepped: output of prepare_actor_params (bf16 weights, f32 biases, ma scalar)
    returns  (B, action_dim) float32
    """
    B, state_dim = state.shape
    action_dim = prepped["w5"].shape[1]

    args = (prepped["ma"], state,
            prepped["w1"], prepped["b1"], prepped["w2"], prepped["b2"],
            prepped["w3"], prepped["b3"], prepped["w4"], prepped["b4"],
            prepped["w5"], prepped["b5"])

    layer_dims = [(state_dim, _HID), (_HID, _HID), (_HID, _HID), (_HID, _HID),
                  (_HID, action_dim)]
    weight_bytes = sum(prepped[f"w{i}"].size * prepped[f"w{i}"].dtype.itemsize
                       for i in range(1, 6))
    bias_bytes = sum(prepped[f"b{i}"].size * prepped[f"b{i}"].dtype.itemsize
                     for i in range(1, 6))
    cost = pl.CostEstimate(
        flops=2 * B * sum(i * o for i, o in layer_dims),
        transcendentals=B * action_dim,
        bytes_accessed=(state.size * state.dtype.itemsize
                        + weight_bytes + bias_bytes
                        + B * action_dim * 4))

    out_shape = jax.ShapeDtypeStruct((B, action_dim), jnp.float32)

    if use_grid is None:
        use_grid = B >= _GRID_MIN_B

    if not use_grid:
        # Small batch (RL action selection): single block, everything
        # VMEM-resident, scalar in SMEM, narrow output.
        vmem = pl.BlockSpec(memory_space=pltpu.MemorySpace.VMEM)
        smem = pl.BlockSpec(memory_space=pltpu.MemorySpace.SMEM)
        return pl.pallas_call(
            _actor_kernel,
            out_shape=out_shape,
            in_specs=[smem] + [vmem] * (len(args) - 1),
            out_specs=vmem,
            cost_estimate=cost,
        )(*args)

    # Large batch: tile rows; weights/biases stay VMEM-resident (constant
    # index_map); the batch axis is parallel and auto-pipelined.
    if tile_b is None:
        tile_b = min(_TILE_B, max(256, pl.cdiv(B, _MIN_TILES)))
        tile_b = min(B, ((tile_b + 7) // 8) * 8)
    grid = (pl.cdiv(B, tile_b),)

    def resident(arr):
        return pl.BlockSpec(arr.shape, lambda i: (0, 0))

    in_specs = [pl.BlockSpec((1, 1), lambda i: (0, 0),
                             memory_space=pltpu.MemorySpace.SMEM),
                pl.BlockSpec((tile_b, state_dim), lambda i: (i, 0))]
    for name in ("w1", "b1", "w2", "b2", "w3", "b3", "w4", "b4", "w5", "b5"):
        in_specs.append(resident(prepped[name]))

    return pl.pallas_call(
        _actor_kernel,
        out_shape=out_shape,
        grid=grid,
        in_specs=in_specs,
        out_specs=pl.BlockSpec((tile_b, action_dim), lambda i: (i, 0)),
        compiler_params=pltpu.CompilerParams(
            dimension_semantics=(pltpu.PARALLEL,),
            vmem_limit_bytes=32 * 1024 * 1024),
        cost_estimate=cost,
    )(*args)


def init_actor_params(key, state_dim, action_dim):
    """Deterministic PyTorch-style (uniform +/- 1/sqrt(fan_in)) init, float32."""
    dims = [
        (state_dim, 128),   # l1
        (128, 128),         # l2
        (128, 64),          # l3
        (64, 128),          # l4  (see TODO(synk) in header)
        (128, action_dim),  # l5
    ]
    params = {}
    keys = jax.random.split(key, 2 * len(dims))
    for i, (fan_in, fan_out) in enumerate(dims):
        bound = 1.0 / jnp.sqrt(jnp.float32(fan_in))
        params[f"w{i + 1}"] = jax.random.uniform(
            keys[2 * i], (fan_in, fan_out),
            minval=-bound, maxval=bound, dtype=jnp.float32)
        params[f"b{i + 1}"] = jax.random.uniform(
            keys[2 * i + 1], (1, fan_out),
            minval=-bound, maxval=bound, dtype=jnp.float32)
    return params


def actor_reference(state, params, max_action):
    """Plain-JAX reference mirroring the kernel's bf16-matmul / f32-accumulate path
    (uses the *unpadded* params, so it also checks the zero-padding is exact)."""
    def lin(x, w, b):
        return jnp.dot(x.astype(jnp.bfloat16), w.astype(jnp.bfloat16),
                       preferred_element_type=jnp.float32) + b
    x = _leaky_relu(lin(state, params["w1"], params["b1"]))
    x = _leaky_relu(lin(x, params["w2"], params["b2"]))
    x = _leaky_relu(lin(x, params["w3"], params["b3"]))
    x = _leaky_relu(lin(x, params["w4"], params["b4"]))
    x = lin(x, params["w5"], params["b5"])
    return jnp.tanh(x) * max_action


if __name__ == "__main__":
    state_dim, action_dim, max_action = 16, 4, 1.0

    key = jax.random.PRNGKey(0)
    k_state, k_params, k_state2 = jax.random.split(key, 3)
    params = init_actor_params(k_params, state_dim, action_dim)

    # One-time param prep (hoisted out of the forward path).
    prepped = prepare_actor_params(params, max_action)
    prepped = jax.block_until_ready(prepped)

    # --- small-batch (grid-less) path, as used in RL action selection ---
    state = jax.random.normal(k_state, (2, state_dim), dtype=jnp.float32)
    out = jax.block_until_ready(actor_forward(state, prepped))
    ref = actor_reference(state, params, max_action)
    assert out.shape == (2, action_dim)
    assert jnp.allclose(out, ref, atol=1e-2, rtol=1e-2), "grid-less path mismatch"

    # --- batched (gridded, parallel) path smoke test ---
    state2 = jax.random.normal(k_state2, (256, state_dim), dtype=jnp.float32)
    out2 = jax.block_until_ready(
        actor_forward(state2, prepped, use_grid=True, tile_b=128))
    ref2 = actor_reference(state2, params, max_action)
    assert out2.shape == (256, action_dim)
    assert jnp.allclose(out2, ref2, atol=1e-2, rtol=1e-2), "gridded path mismatch"

    print("KERNEL_OK")
</pallas_src>

<mosaic_0001>
module attributes {stable_mosaic.version = 11 : i64} {
  func.func @_actor_kernel(%arg0: memref<1x1xf32, #tpu.memory_space<smem>>, %arg1: memref<2x16xf32, #tpu.memory_space<vmem>>, %arg2: memref<16x128xbf16, #tpu.memory_space<vmem>>, %arg3: memref<1x128xf32, #tpu.memory_space<vmem>>, %arg4: memref<128x128xbf16, #tpu.memory_space<vmem>>, %arg5: memref<1x128xf32, #tpu.memory_space<vmem>>, %arg6: memref<128x128xbf16, #tpu.memory_space<vmem>>, %arg7: memref<1x128xf32, #tpu.memory_space<vmem>>, %arg8: memref<128x128xbf16, #tpu.memory_space<vmem>>, %arg9: memref<1x128xf32, #tpu.memory_space<vmem>>, %arg10: memref<128x4xbf16, #tpu.memory_space<vmem>>, %arg11: memref<1x4xf32, #tpu.memory_space<vmem>>, %arg12: memref<2x4xf32, #tpu.memory_space<vmem>>) attributes {dimension_semantics = [], scalar_prefetch = 0 : i64, scratch_operands = 0 : i64, tpu.core_type = #tpu.core_type<tc>} {
    %c0 = arith.constant 0 : index
    %c0_0 = arith.constant 0 : index
    %0 = memref.load %arg0[%c0, %c0_0] : memref<1x1xf32, #tpu.memory_space<smem>>
    %c0_1 = arith.constant 0 : index
    %c0_2 = arith.constant 0 : index
    %1 = vector.load %arg1[%c0_1, %c0_2] : memref<2x16xf32, #tpu.memory_space<vmem>>, vector<2x16xf32>
    %c0_3 = arith.constant 0 : index
    %c0_4 = arith.constant 0 : index
    %2 = vector.load %arg2[%c0_3, %c0_4] : memref<16x128xbf16, #tpu.memory_space<vmem>>, vector<16x128xbf16>
    %c0_5 = arith.constant 0 : index
    %c0_6 = arith.constant 0 : index
    %3 = vector.load %arg3[%c0_5, %c0_6] : memref<1x128xf32, #tpu.memory_space<vmem>>, vector<1x128xf32>
    %4 = arith.truncf %1 : vector<2x16xf32> to vector<2x16xbf16>
    %cst = arith.constant dense<0.000000e+00> : vector<2x128xf32>
    %5 = tpu.matmul %4, %2, %cst {dimension_numbers = #tpu.dot_dimension_numbers<[1], [0], [0], [1], [0, 0, 1, 1], [], []>} : vector<2x16xbf16>, vector<16x128xbf16>, vector<2x128xf32> -> vector<2x128xf32>
    %6 = vector.broadcast %3 : vector<1x128xf32> to vector<2x128xf32>
    %7 = arith.addf %5, %6 : vector<2x128xf32>
    %cst_7 = arith.constant 0.00999999977 : f32
    %8 = vector.broadcast %cst_7 : f32 to vector<2x128xf32>
    %9 = arith.mulf %8, %7 : vector<2x128xf32>
    %10 = arith.maximumf %7, %9 : vector<2x128xf32>
    %c0_8 = arith.constant 0 : index
    %c0_9 = arith.constant 0 : index
    %11 = vector.load %arg4[%c0_8, %c0_9] : memref<128x128xbf16, #tpu.memory_space<vmem>>, vector<128x128xbf16>
    %c0_10 = arith.constant 0 : index
    %c0_11 = arith.constant 0 : index
    %12 = vector.load %arg5[%c0_10, %c0_11] : memref<1x128xf32, #tpu.memory_space<vmem>>, vector<1x128xf32>
    %13 = arith.truncf %10 : vector<2x128xf32> to vector<2x128xbf16>
    %cst_12 = arith.constant dense<0.000000e+00> : vector<2x128xf32>
    %14 = tpu.matmul %13, %11, %cst_12 {dimension_numbers = #tpu.dot_dimension_numbers<[1], [0], [0], [1], [0, 0, 1, 1], [], []>} : vector<2x128xbf16>, vector<128x128xbf16>, vector<2x128xf32> -> vector<2x128xf32>
    %15 = vector.broadcast %12 : vector<1x128xf32> to vector<2x128xf32>
    %16 = arith.addf %14, %15 : vector<2x128xf32>
    %cst_13 = arith.constant 0.00999999977 : f32
    %17 = vector.broadcast %cst_13 : f32 to vector<2x128xf32>
    %18 = arith.mulf %17, %16 : vector<2x128xf32>
    %19 = arith.maximumf %16, %18 : vector<2x128xf32>
    %c0_14 = arith.constant 0 : index
    %c0_15 = arith.constant 0 : index
    %20 = vector.load %arg6[%c0_14, %c0_15] : memref<128x128xbf16, #tpu.memory_space<vmem>>, vector<128x128xbf16>
    %c0_16 = arith.constant 0 : index
    %c0_17 = arith.constant 0 : index
    %21 = vector.load %arg7[%c0_16, %c0_17] : memref<1x128xf32, #tpu.memory_space<vmem>>, vector<1x128xf32>
    %22 = arith.truncf %19 : vector<2x128xf32> to vector<2x128xbf16>
    %cst_18 = arith.constant dense<0.000000e+00> : vector<2x128xf32>
    %23 = tpu.matmul %22, %20, %cst_18 {dimension_numbers = #tpu.dot_dimension_numbers<[1], [0], [0], [1], [0, 0, 1, 1], [], []>} : vector<2x128xbf16>, vector<128x128xbf16>, vector<2x128xf32> -> vector<2x128xf32>
    %24 = vector.broadcast %21 : vector<1x128xf32> to vector<2x128xf32>
    %25 = arith.addf %23, %24 : vector<2x128xf32>
    %cst_19 = arith.constant 0.00999999977 : f32
    %26 = vector.broadcast %cst_19 : f32 to vector<2x128xf32>
    %27 = arith.mulf %26, %25 : vector<2x128xf32>
    %28 = arith.maximumf %25, %27 : vector<2x128xf32>
    %c0_20 = arith.constant 0 : index
    %c0_21 = arith.constant 0 : index
    %29 = vector.load %arg8[%c0_20, %c0_21] : memref<128x128xbf16, #tpu.memory_space<vmem>>, vector<128x128xbf16>
    %c0_22 = arith.constant 0 : index
    %c0_23 = arith.constant 0 : index
    %30 = vector.load %arg9[%c0_22, %c0_23] : memref<1x128xf32, #tpu.memory_space<vmem>>, vector<1x128xf32>
    %31 = arith.truncf %28 : vector<2x128xf32> to vector<2x128xbf16>
    %cst_24 = arith.constant dense<0.000000e+00> : vector<2x128xf32>
    %32 = tpu.matmul %31, %29, %cst_24 {dimension_numbers = #tpu.dot_dimension_numbers<[1], [0], [0], [1], [0, 0, 1, 1], [], []>} : vector<2x128xbf16>, vector<128x128xbf16>, vector<2x128xf32> -> vector<2x128xf32>
    %33 = vector.broadcast %30 : vector<1x128xf32> to vector<2x128xf32>
    %34 = arith.addf %32, %33 : vector<2x128xf32>
    %cst_25 = arith.constant 0.00999999977 : f32
    %35 = vector.broadcast %cst_25 : f32 to vector<2x128xf32>
    %36 = arith.mulf %35, %34 : vector<2x128xf32>
    %37 = arith.maximumf %34, %36 : vector<2x128xf32>
    %c0_26 = arith.constant 0 : index
    %c0_27 = arith.constant 0 : index
    %38 = vector.load %arg10[%c0_26, %c0_27] : memref<128x4xbf16, #tpu.memory_space<vmem>>, vector<128x4xbf16>
    %c0_28 = arith.constant 0 : index
    %c0_29 = arith.constant 0 : index
    %39 = vector.load %arg11[%c0_28, %c0_29] : memref<1x4xf32, #tpu.memory_space<vmem>>, vector<1x4xf32>
    %40 = arith.truncf %37 : vector<2x128xf32> to vector<2x128xbf16>
    %cst_30 = arith.constant dense<0.000000e+00> : vector<2x4xf32>
    %41 = tpu.matmul %40, %38, %cst_30 {dimension_numbers = #tpu.dot_dimension_numbers<[1], [0], [0], [1], [0, 0, 1, 1], [], []>} : vector<2x128xbf16>, vector<128x4xbf16>, vector<2x4xf32> -> vector<2x4xf32>
    %42 = vector.broadcast %39 : vector<1x4xf32> to vector<2x4xf32>
    %43 = arith.addf %41, %42 : vector<2x4xf32>
    %44 = math.tanh %43 : vector<2x4xf32>
    %45 = vector.broadcast %0 : f32 to vector<2x4xf32>
    %46 = arith.mulf %44, %45 : vector<2x4xf32>
    %c0_31 = arith.constant 0 : index
    %c0_32 = arith.constant 0 : index
    %47 = vector.load %arg12[%c0_31, %c0_32] : memref<2x4xf32, #tpu.memory_space<vmem>>, vector<2x4xf32>
    tpu.vector_store %arg12[%c0_31, %c0_32], %46 {strides = array<i32>} : memref<2x4xf32, #tpu.memory_space<vmem>>, vector<2x4xf32>,
    return
  }
}

</mosaic_0001>

<llo_original>
// kernel: tpu_custom_call.1
$region0: #{tpu_custom_call.1}
  #allocation0 [shape = 'u32[]', space=smem, size = 0x4, offset = 0x4, fixed_abs, tag = 'smem constant byte address 0x4 - core index']
  #allocation1 [shape = 'u32[144,128]{1,0:T(1,128)}', space=vmem, size = 0x12000, scoped, tag = 'internal scratch']
  #allocation2 [shape = 'f32[1,1]{1,0:T(1,128)S(6)}', space=smem, size = 0x200, scoped, tag = 'scoped memory for tpu_custom_call.1']
  %s0 = inlined_call_operand.<no memory space> [shape: f32[1,1], index: 0, kind: input, shape index: {}]
  %s1 = inlined_call_operand.hbm [shape: f32[2,16], index: 1, kind: input, shape index: {}]
  %s2 = inlined_call_operand.vmem [shape: bf16[16,128], index: 2, kind: input, shape index: {}]
  %s3 = inlined_call_operand.vmem [shape: f32[1,128], index: 3, kind: input, shape index: {}]
  %s4 = inlined_call_operand.vmem [shape: bf16[128,128], index: 4, kind: input, shape index: {}]
  %s5 = inlined_call_operand.hbm [shape: f32[1,128], index: 5, kind: input, shape index: {}]
  %s6 = inlined_call_operand.hbm [shape: bf16[128,128], index: 6, kind: input, shape index: {}]
  %s7 = inlined_call_operand.vmem [shape: f32[1,128], index: 7, kind: input, shape index: {}]
  %s8 = inlined_call_operand.hbm [shape: bf16[128,128], index: 8, kind: input, shape index: {}]
  %s9 = inlined_call_operand.vmem [shape: f32[1,128], index: 9, kind: input, shape index: {}]
  %s10 = inlined_call_operand.vmem [shape: bf16[128,4], index: 10, kind: input, shape index: {}]
  %s11 = inlined_call_operand.vmem [shape: f32[1,4], index: 11, kind: input, shape index: {}]
  %s12 = inlined_call_operand.hbm [shape: f32[2,4], index: 12, kind: output, shape index: {}]
  %s13 = sld [smem:[#allocation0]]
  $region74: #{tpu_custom_call.1} parent=0
    _
  %s15 = ssub.s32 1, %s13
  %s16 = scalar_select 0, %s15, %s13
  %17 = sst [smem:[#allocation2]] %s0
  $region1: #{tpu_custom_call.1} parent=0
    #allocation3 [shape = 'u8[1024]{0}', space=vmem, size = 0x400, scoped, tag = 'input window, operand 1, single buffered']
    #allocation4 [shape = 's32[1]{0}', space=sflag, size = 0x4, scoped, tag = 'scoped memory for tpu_custom_call.1']
    #allocation5 [shape = 's32[1]{0}', space=sflag, size = 0x4, scoped, tag = 'scoped memory for tpu_custom_call.1']
    #allocation6 [shape = 'u8[512]{0}', space=vmem, size = 0x400, scoped, tag = 'input window, operand 5, single buffered']
    #allocation7 [shape = 's32[1]{0}', space=sflag, size = 0x4, scoped, tag = 'scoped memory for tpu_custom_call.1']
    #allocation8 [shape = 'u8[32768]{0}', space=vmem, size = 0x8000, scoped, tag = 'input window, operand 6, single buffered']
    #allocation9 [shape = 'u8[32768]{0}', space=vmem, size = 0x8000, scoped, tag = 'input window, operand 8, single buffered']
    #allocation10 [shape = 's32[1]{0}', space=sflag, size = 0x4, scoped, tag = 'scoped memory for tpu_custom_call.1']
    #allocation11 [shape = 'u8[1024]{0}', space=vmem, size = 0x400, scoped, tag = 'output window, operand 0, single buffered']
    %18 = vsyncpa [#allocation4], 0
    %19 = vsyncpa [#allocation7], 0
    %20 = vsyncpa [#allocation10], 0
    %21 = vsyncpa [#allocation5], 0
    // Predicated region
    $region2: #{tpu_custom_call.1} parent=1 // pred_check
      _
    $region3: #{tpu_custom_call.1} parent=1 // pred_check_branch
      %23 = sbr.rel (0) target = $region5
    $region4: #{tpu_custom_call.1} parent=1 // pred_region
      _
    $region5: #{tpu_custom_call.1} parent=1 // pred_fallthru
      _
    // Predicated region
    $region6: #{tpu_custom_call.1} parent=1 // pred_check
      _
    $region7: #{tpu_custom_call.1} parent=1 // pred_check_branch
      %25 = sbr.rel (0) target = $region9
    $region8: #{tpu_custom_call.1} parent=1 // pred_region
      %s27 = ssub.s32 32, 32
      %28 = vsyncadd [#allocation4], %s27
      %s30 = sshll.u32 [#allocation3], 4
      %s31 = int_to_ptr.vmem [resolvable:$true] %s30
      %33 = dma.hbm_to_vmem [thread:$0]  %s1, 32, %s31, [#allocation4]
    $region9: #{tpu_custom_call.1} parent=1 // pred_fallthru
      _
    // Predicated region
    $region10: #{tpu_custom_call.1} parent=1 // pred_check
      _
    $region11: #{tpu_custom_call.1} parent=1 // pred_check_branch
      %35 = sbr.rel (0) target = $region13
    $region12: #{tpu_custom_call.1} parent=1 // pred_region
      _
    $region13: #{tpu_custom_call.1} parent=1 // pred_fallthru
      _
    // Predicated region
    $region14: #{tpu_custom_call.1} parent=1 // pred_check
      _
    $region15: #{tpu_custom_call.1} parent=1 // pred_check_branch
      %37 = sbr.rel (0) target = $region17
    $region16: #{tpu_custom_call.1} parent=1 // pred_region
      _
    $region17: #{tpu_custom_call.1} parent=1 // pred_fallthru
      _
    // Predicated region
    $region18: #{tpu_custom_call.1} parent=1 // pred_check
      _
    $region19: #{tpu_custom_call.1} parent=1 // pred_check_branch
      %39 = sbr.rel (0) target = $region21
    $region20: #{tpu_custom_call.1} parent=1 // pred_region
      _
    $region21: #{tpu_custom_call.1} parent=1 // pred_fallthru
      _
    // Predicated region
    $region22: #{tpu_custom_call.1} parent=1 // pred_check
      _
    $region23: #{tpu_custom_call.1} parent=1 // pred_check_branch
      %41 = sbr.rel (0) target = $region25
    $region24: #{tpu_custom_call.1} parent=1 // pred_region
      %s43 = ssub.s32 16, 16
      %44 = vsyncadd [#allocation7], %s43
      %s46 = sshll.u32 [#allocation6], 4
      %s47 = int_to_ptr.vmem [resolvable:$true] %s46
      %49 = dma.hbm_to_vmem [thread:$0]  %s5, 16, %s47, [#allocation7]
    $region25: #{tpu_custom_call.1} parent=1 // pred_fallthru
      _
    // Predicated region
    $region26: #{tpu_custom_call.1} parent=1 // pred_check
      _
    $region27: #{tpu_custom_call.1} parent=1 // pred_check_branch
      %51 = sbr.rel (0) target = $region29
    $region28: #{tpu_custom_call.1} parent=1 // pred_region
      %s53 = ssub.s32 1024, 1024
      %54 = vsyncadd [#allocation7], %s53
      %s55 = sshll.u32 [#allocation8], 4
      %s56 = int_to_ptr.vmem [resolvable:$true] %s55
      %61 = dma.hbm_to_vmem [thread:$0]  %s6, 1024, %s56, [#allocation7], 64, 64, 4
    $region29: #{tpu_custom_call.1} parent=1 // pred_fallthru
      _
    // Predicated region
    $region30: #{tpu_custom_call.1} parent=1 // pred_check
      _
    $region31: #{tpu_custom_call.1} parent=1 // pred_check_branch
      %63 = sbr.rel (0) target = $region33
    $region32: #{tpu_custom_call.1} parent=1 // pred_region
      _
    $region33: #{tpu_custom_call.1} parent=1 // pred_fallthru
      _
    // Predicated region
    $region34: #{tpu_custom_call.1} parent=1 // pred_check
      _
    $region35: #{tpu_custom_call.1} parent=1 // pred_check_branch
      %65 = sbr.rel (0) target = $region37
    $region36: #{tpu_custom_call.1} parent=1 // pred_region
      %s67 = ssub.s32 1024, 1024
      %68 = vsyncadd [#allocation10], %s67
      %s69 = sshll.u32 [#allocation9], 4
      %s70 = int_to_ptr.vmem [resolvable:$true] %s69
      %75 = dma.hbm_to_vmem [thread:$0]  %s8, 1024, %s70, [#allocation10], 64, 64, 4
    $region37: #{tpu_custom_call.1} parent=1 // pred_fallthru
      _
    // Predicated region
    $region38: #{tpu_custom_call.1} parent=1 // pred_check
      _
    $region39: #{tpu_custom_call.1} parent=1 // pred_check_branch
      %77 = sbr.rel (0) target = $region41
    $region40: #{tpu_custom_call.1} parent=1 // pred_region
      _
    $region41: #{tpu_custom_call.1} parent=1 // pred_fallthru
      _
    // Predicated region
    $region42: #{tpu_custom_call.1} parent=1 // pred_check
      _
    $region43: #{tpu_custom_call.1} parent=1 // pred_check_branch
      %79 = sbr.rel (0) target = $region45
    $region44: #{tpu_custom_call.1} parent=1 // pred_region
      _
    $region45: #{tpu_custom_call.1} parent=1 // pred_fallthru
      _
    // Predicated region
    $region46: #{tpu_custom_call.1} parent=1 // pred_check
      _
    $region47: #{tpu_custom_call.1} parent=1 // pred_check_branch
      %81 = sbr.rel (0) target = $region49
    $region48: #{tpu_custom_call.1} parent=1 // pred_region
      _
    $region49: #{tpu_custom_call.1} parent=1 // pred_fallthru
      _
    // Predicated region
    $region50: #{tpu_custom_call.1} parent=1 // pred_check
      _
    $region51: #{tpu_custom_call.1} parent=1 // pred_check_branch
      %83 = sbr.rel (0) target = $region53
    $region52: #{tpu_custom_call.1} parent=1 // pred_region
      %84 = dma.done [#allocation4], 32
    $region53: #{tpu_custom_call.1} parent=1 // pred_fallthru
      _
    // Predicated region
    $region54: #{tpu_custom_call.1} parent=1 // pred_check
      _
    $region55: #{tpu_custom_call.1} parent=1 // pred_check_branch
      %86 = sbr.rel (0) target = $region57
    $region56: #{tpu_custom_call.1} parent=1 // pred_region
      %87 = dma.done [#allocation7], 16
    $region57: #{tpu_custom_call.1} parent=1 // pred_fallthru
      _
    // Predicated region
    $region58: #{tpu_custom_call.1} parent=1 // pred_check
      _
    $region59: #{tpu_custom_call.1} parent=1 // pred_check_branch
      %89 = sbr.rel (0) target = $region61
    $region60: #{tpu_custom_call.1} parent=1 // pred_region
      %90 = dma.done [#allocation7], 1024
    $region61: #{tpu_custom_call.1} parent=1 // pred_fallthru
      _
    // Predicated region
    $region62: #{tpu_custom_call.1} parent=1 // pred_check
      _
    $region63: #{tpu_custom_call.1} parent=1 // pred_check_branch
      %92 = sbr.rel (0) target = $region65
    $region64: #{tpu_custom_call.1} parent=1 // pred_region
      %93 = dma.done [#allocation10], 1024
    $region65: #{tpu_custom_call.1} parent=1 // pred_fallthru
      _
    %s95 = sld [smem:[#allocation2]]
    %v96 = vld [vmem:[#allocation3] sm:$0x3]
    %v97 = vld [vmem:[%s2] sm:$0xf]
    %v98 = vld [vmem:[%s2 + $0x4] sm:$0xf]
    %v99 = vld [vmem:[%s3] sm:$0x1]
    %v100 = vpack.c.bf16 %v96, %v96
    %v102 = vlaneseq
    %v103 = vshrl.u32 %v102, 7
    %v104 = vsub.s32 0, %v103
    %v105 = vrot.slane %v99, %v104
    %v109 = vunpack.c.l.b16 %v97
    %v110 = vunpack.c.l.b16 %v98
    %v111 = vpack.c.b16 %v110, %v109
    %vm113 = vcmask 130048
    %v115 = vsel %vm113, %v100, 0
    %117 = vmatprep.subr.bf16.mxu0 0
    %118 = vmatpush1.bf16.msra.mxu0 0
    %119 = vmatprep.subr.bf16.mxu0 0
    %120 = vmatpush1.bf16.msra.mxu0 0
    %121 = vmatprep.subr.bf16.mxu0 0
    %122 = vmatpush1.bf16.msra.mxu0 0
    %123 = vmatprep.subr.bf16.mxu0 0
    %124 = vmatpush1.bf16.msra.mxu0 0
    %125 = vmatprep.subr.bf16.mxu0 0
    %126 = vmatpush1.bf16.msra.mxu0 0
    %127 = vmatprep.subr.bf16.mxu0 0
    %128 = vmatpush1.bf16.msra.mxu0 0
    %129 = vmatprep.subr.bf16.mxu0 0
    %130 = vmatpush1.bf16.msra.mxu0 0
    %131 = vmatprep.subr.bf16.mxu0 0
    %132 = vmatpush1.bf16.msra.mxu0 %v111
    %133 = vmatprep.subr.bf16.mxu0 0
    %134 = vmatpush2.bf16.msra.mxu0 0
    %135 = vmatprep.subr.bf16.mxu0 0
    %136 = vmatpush2.bf16.msra.mxu0 0
    %137 = vmatprep.subr.bf16.mxu0 0
    %138 = vmatpush2.bf16.msra.mxu0 0
    %139 = vmatprep.subr.bf16.mxu0 0
    %140 = vmatpush2.bf16.msra.mxu0 0
    %141 = vmatprep.subr.bf16.mxu0 0
    %142 = vmatpush2.bf16.msra.mxu0 0
    %143 = vmatprep.subr.bf16.mxu0 0
    %144 = vmatpush2.bf16.msra.mxu0 0
    %145 = vmatprep.subr.bf16.mxu0 0
    %146 = vmatpush2.bf16.msra.mxu0 0
    %147 = vmatprep.subr.bf16.mxu0 0
    %148 = vmatpush2.bf16.msra.mxu0 0
    %149 = vmatprep.mubr.bf16.mxu0 0
    %150 = vmatmul.mubr.bf16.gmra.mxu0 %v115
    %v151 = vpop.f32.mrf.mxu0
    %v152 = vadd.f32 %v105, %v151
    %v153 = vpop.f32.mrf.mxu0
    %v154 = vpop.f32.mrf.mxu0
    %v155 = vpop.f32.mrf.mxu0
    %156 = vdwg.mxu0
    %v157 = vmul.f32 %v152, 0.01
    %v158 = vmax.f32 %v152, %v157
    %v159 = vld [vmem:[%s4] sm:$0xf]
    %v160 = vld [vmem:[%s4 + $0x4] sm:$0xf]
    %v161 = vld [vmem:[%s4 + $0x8] sm:$0xf]
    %v162 = vld [vmem:[%s4 + $0xc] sm:$0xf]
    %v163 = vld [vmem:[%s4 + $0x10] sm:$0xf]
    %v164 = vld [vmem:[%s4 + $0x14] sm:$0xf]
    %v165 = vld [vmem:[%s4 + $0x18] sm:$0xf]
    %v166 = vld [vmem:[%s4 + $0x1c] sm:$0xf]
    %v167 = vld [vmem:[%s4 + $0x20] sm:$0xf]
    %v168 = vld [vmem:[%s4 + $0x24] sm:$0xf]
    %v169 = vld [vmem:[%s4 + $0x28] sm:$0xf]
    %v170 = vld [vmem:[%s4 + $0x2c] sm:$0xf]
    %v171 = vld [vmem:[%s4 + $0x30] sm:$0xf]
    %v172 = vld [vmem:[%s4 + $0x34] sm:$0xf]
    %v173 = vld [vmem:[%s4 + $0x38] sm:$0xf]
    %v174 = vld [vmem:[%s4 + $0x3c] sm:$0xf]
    %v175 = vld [vmem:[#allocation6] sm:$0x1]
    %v176 = vpack.c.bf16 %v158, %v158
    %v178 = vlaneseq
    %v179 = vshrl.u32 %v178, 7
    %v180 = vsub.s32 0, %v179
    %v181 = vrot.slane %v175, %v180
    %v199 = vunpack.c.l.b16 %v159
    %v200 = vunpack.c.l.b16 %v160
    %v201 = vunpack.c.l.b16 %v161
    %v202 = vunpack.c.l.b16 %v162
    %v203 = vunpack.c.l.b16 %v163
    %v204 = vunpack.c.l.b16 %v164
    %v205 = vunpack.c.l.b16 %v165
    %v206 = vunpack.c.l.b16 %v166
    %v207 = vunpack.c.l.b16 %v167
    %v208 = vunpack.c.l.b16 %v168
    %v209 = vunpack.c.l.b16 %v169
    %v210 = vunpack.c.l.b16 %v170
    %v211 = vunpack.c.l.b16 %v171
    %v212 = vunpack.c.l.b16 %v172
    %v213 = vunpack.c.l.b16 %v173
    %v214 = vunpack.c.l.b16 %v174
    %v215 = vpack.c.b16 %v200, %v199
    %v216 = vpack.c.b16 %v202, %v201
    %v217 = vpack.c.b16 %v204, %v203
    %v218 = vpack.c.b16 %v206, %v205
    %v219 = vpack.c.b16 %v208, %v207
    %v220 = vpack.c.b16 %v210, %v209
    %v221 = vpack.c.b16 %v212, %v211
    %v222 = vpack.c.b16 %v214, %v213
    %231 = vmatprep.subr.bf16.mxu0 0
    %232 = vmatpush1.bf16.msra.mxu0 %v222
    %233 = vmatprep.subr.bf16.mxu0 0
    %234 = vmatpush1.bf16.msra.mxu0 %v221
    %235 = vmatprep.subr.bf16.mxu0 0
    %236 = vmatpush1.bf16.msra.mxu0 %v220
    %237 = vmatprep.subr.bf16.mxu0 0
    %238 = vmatpush1.bf16.msra.mxu0 %v219
    %239 = vmatprep.subr.bf16.mxu0 0
    %240 = vmatpush1.bf16.msra.mxu0 %v218
    %241 = vmatprep.subr.bf16.mxu0 0
    %242 = vmatpush1.bf16.msra.mxu0 %v217
    %243 = vmatprep.subr.bf16.mxu0 0
    %244 = vmatpush1.bf16.msra.mxu0 %v216
    %245 = vmatprep.subr.bf16.mxu0 0
    %246 = vmatpush1.bf16.msra.mxu0 %v215
    %247 = vmatprep.subr.bf16.mxu0 0
    %248 = vmatpush2.bf16.msra.mxu0 0
    %249 = vmatprep.subr.bf16.mxu0 0
    %250 = vmatpush2.bf16.msra.mxu0 0
    %251 = vmatprep.subr.bf16.mxu0 0
    %252 = vmatpush2.bf16.msra.mxu0 0
    %253 = vmatprep.subr.bf16.mxu0 0
    %254 = vmatpush2.bf16.msra.mxu0 0
    %255 = vmatprep.subr.bf16.mxu0 0
    %256 = vmatpush2.bf16.msra.mxu0 0
    %257 = vmatprep.subr.bf16.mxu0 0
    %258 = vmatpush2.bf16.msra.mxu0 0
    %259 = vmatprep.subr.bf16.mxu0 0
    %260 = vmatpush2.bf16.msra.mxu0 0
    %261 = vmatprep.subr.bf16.mxu0 0
    %262 = vmatpush2.bf16.msra.mxu0 0
    %263 = vmatprep.mubr.bf16.mxu0 0
    %264 = vmatmul.mubr.bf16.gmra.mxu0 %v176
    %v265 = vpop.f32.mrf.mxu0
    %v266 = vadd.f32 %v181, %v265
    %v267 = vpop.f32.mrf.mxu0
    %v268 = vpop.f32.mrf.mxu0
    %v269 = vpop.f32.mrf.mxu0
    %270 = vdwg.mxu0
    %v271 = vmul.f32 %v266, 0.01
    %v272 = vmax.f32 %v266, %v271
    %v273 = vld [vmem:[#allocation8] sm:$0xf]
    %v274 = vld [vmem:[#allocation8 + $0x4] sm:$0xf]
    %v275 = vld [vmem:[#allocation8 + $0x8] sm:$0xf]
    %v276 = vld [vmem:[#allocation8 + $0xc] sm:$0xf]
    %v277 = vld [vmem:[#allocation8 + $0x10] sm:$0xf]
    %v278 = vld [vmem:[#allocation8 + $0x14] sm:$0xf]
    %v279 = vld [vmem:[#allocation8 + $0x18] sm:$0xf]
    %v280 = vld [vmem:[#allocation8 + $0x1c] sm:$0xf]
    %v281 = vld [vmem:[#allocation8 + $0x20] sm:$0xf]
    %v282 = vld [vmem:[#allocation8 + $0x24] sm:$0xf]
    %v283 = vld [vmem:[#allocation8 + $0x28] sm:$0xf]
    %v284 = vld [vmem:[#allocation8 + $0x2c] sm:$0xf]
    %v285 = vld [vmem:[#allocation8 + $0x30] sm:$0xf]
    %v286 = vld [vmem:[#allocation8 + $0x34] sm:$0xf]
    %v287 = vld [vmem:[#allocation8 + $0x38] sm:$0xf]
    %v288 = vld [vmem:[#allocation8 + $0x3c] sm:$0xf]
    %v289 = vld [vmem:[%s7] sm:$0x1]
    %v290 = vpack.c.bf16 %v272, %v272
    %v292 = vlaneseq
    %v293 = vshrl.u32 %v292, 7
    %v294 = vsub.s32 0, %v293
    %v295 = vrot.slane %v289, %v294
    %v313 = vunpack.c.l.b16 %v273
    %v314 = vunpack.c.l.b16 %v274
    %v315 = vunpack.c.l.b16 %v275
    %v316 = vunpack.c.l.b16 %v276
    %v317 = vunpack.c.l.b16 %v277
    %v318 = vunpack.c.l.b16 %v278
    %v319 = vunpack.c.l.b16 %v279
    %v320 = vunpack.c.l.b16 %v280
    %v321 = vunpack.c.l.b16 %v281
    %v322 = vunpack.c.l.b16 %v282
    %v323 = vunpack.c.l.b16 %v283
    %v324 = vunpack.c.l.b16 %v284
    %v325 = vunpack.c.l.b16 %v285
    %v326 = vunpack.c.l.b16 %v286
    %v327 = vunpack.c.l.b16 %v287
    %v328 = vunpack.c.l.b16 %v288
    %v329 = vpack.c.b16 %v314, %v313
    %v330 = vpack.c.b16 %v316, %v315
    %v331 = vpack.c.b16 %v318, %v317
    %v332 = vpack.c.b16 %v320, %v319
    %v333 = vpack.c.b16 %v322, %v321
    %v334 = vpack.c.b16 %v324, %v323
    %v335 = vpack.c.b16 %v326, %v325
    %v336 = vpack.c.b16 %v328, %v327
    %345 = vmatprep.subr.bf16.mxu0 0
    %346 = vmatpush1.bf16.msra.mxu0 %v336
    %347 = vmatprep.subr.bf16.mxu0 0
    %348 = vmatpush1.bf16.msra.mxu0 %v335
    %349 = vmatprep.subr.bf16.mxu0 0
    %350 = vmatpush1.bf16.msra.mxu0 %v334
    %351 = vmatprep.subr.bf16.mxu0 0
    %352 = vmatpush1.bf16.msra.mxu0 %v333
    %353 = vmatprep.subr.bf16.mxu0 0
    %354 = vmatpush1.bf16.msra.mxu0 %v332
    %355 = vmatprep.subr.bf16.mxu0 0
    %356 = vmatpush1.bf16.msra.mxu0 %v331
    %357 = vmatprep.subr.bf16.mxu0 0
    %358 = vmatpush1.bf16.msra.mxu0 %v330
    %359 = vmatprep.subr.bf16.mxu0 0
    %360 = vmatpush1.bf16.msra.mxu0 %v329
    %361 = vmatprep.subr.bf16.mxu0 0
    %362 = vmatpush2.bf16.msra.mxu0 0
    %363 = vmatprep.subr.bf16.mxu0 0
    %364 = vmatpush2.bf16.msra.mxu0 0
    %365 = vmatprep.subr.bf16.mxu0 0
    %366 = vmatpush2.bf16.msra.mxu0 0
    %367 = vmatprep.subr.bf16.mxu0 0
    %368 = vmatpush2.bf16.msra.mxu0 0
    %369 = vmatprep.subr.bf16.mxu0 0
    %370 = vmatpush2.bf16.msra.mxu0 0
    %371 = vmatprep.subr.bf16.mxu0 0
    %372 = vmatpush2.bf16.msra.mxu0 0
    %373 = vmatprep.subr.bf16.mxu0 0
    %374 = vmatpush2.bf16.msra.mxu0 0
    %375 = vmatprep.subr.bf16.mxu0 0
    %376 = vmatpush2.bf16.msra.mxu0 0
    %377 = vmatprep.mubr.bf16.mxu0 0
    %378 = vmatmul.mubr.bf16.gmra.mxu0 %v290
    %v379 = vpop.f32.mrf.mxu0
    %v380 = vadd.f32 %v295, %v379
    %v381 = vpop.f32.mrf.mxu0
    %v382 = vpop.f32.mrf.mxu0
    %v383 = vpop.f32.mrf.mxu0
    %384 = vdwg.mxu0
    %v385 = vmul.f32 %v380, 0.01
    %v386 = vmax.f32 %v380, %v385
    %v387 = vld [vmem:[#allocation9] sm:$0xf]
    %v388 = vld [vmem:[#allocation9 + $0x4] sm:$0xf]
    %v389 = vld [vmem:[#allocation9 + $0x8] sm:$0xf]
    %v390 = vld [vmem:[#allocation9 + $0xc] sm:$0xf]
    %v391 = vld [vmem:[#allocation9 + $0x10] sm:$0xf]
    %v392 = vld [vmem:[#allocation9 + $0x14] sm:$0xf]
    %v393 = vld [vmem:[#allocation9 + $0x18] sm:$0xf]
    %v394 = vld [vmem:[#allocation9 + $0x1c] sm:$0xf]
    %v395 = vld [vmem:[#allocation9 + $0x20] sm:$0xf]
    %v396 = vld [vmem:[#allocation9 + $0x24] sm:$0xf]
    %v397 = vld [vmem:[#allocation9 + $0x28] sm:$0xf]
    %v398 = vld [vmem:[#allocation9 + $0x2c] sm:$0xf]
    %v399 = vld [vmem:[#allocation9 + $0x30] sm:$0xf]
    %v400 = vld [vmem:[#allocation9 + $0x34] sm:$0xf]
    %v401 = vld [vmem:[#allocation9 + $0x38] sm:$0xf]
    %v402 = vld [vmem:[#allocation9 + $0x3c] sm:$0xf]
    %v403 = vld [vmem:[%s9] sm:$0x1]
    %v404 = vpack.c.bf16 %v386, %v386
    %v406 = vlaneseq
    %v407 = vshrl.u32 %v406, 7
    %v408 = vsub.s32 0, %v407
    %v409 = vrot.slane %v403, %v408
    %v427 = vunpack.c.l.b16 %v387
    %v428 = vunpack.c.l.b16 %v388
    %v429 = vunpack.c.l.b16 %v389
    %v430 = vunpack.c.l.b16 %v390
    %v431 = vunpack.c.l.b16 %v391
    %v432 = vunpack.c.l.b16 %v392
    %v433 = vunpack.c.l.b16 %v393
    %v434 = vunpack.c.l.b16 %v394
    %v435 = vunpack.c.l.b16 %v395
    %v436 = vunpack.c.l.b16 %v396
    %v437 = vunpack.c.l.b16 %v397
    %v438 = vunpack.c.l.b16 %v398
    %v439 = vunpack.c.l.b16 %v399
    %v440 = vunpack.c.l.b16 %v400
    %v441 = vunpack.c.l.b16 %v401
    %v442 = vunpack.c.l.b16 %v402
    %v443 = vpack.c.b16 %v428, %v427
    %v444 = vpack.c.b16 %v430, %v429
    %v445 = vpack.c.b16 %v432, %v431
    %v446 = vpack.c.b16 %v434, %v433
    %v447 = vpack.c.b16 %v436, %v435
    %v448 = vpack.c.b16 %v438, %v437
    %v449 = vpack.c.b16 %v440, %v439
    %v450 = vpack.c.b16 %v442, %v441
    %459 = vmatprep.subr.bf16.mxu0 0
    %460 = vmatpush1.bf16.msra.mxu0 %v450
    %461 = vmatprep.subr.bf16.mxu0 0
    %462 = vmatpush1.bf16.msra.mxu0 %v449
    %463 = vmatprep.subr.bf16.mxu0 0
    %464 = vmatpush1.bf16.msra.mxu0 %v448
    %465 = vmatprep.subr.bf16.mxu0 0
    %466 = vmatpush1.bf16.msra.mxu0 %v447
    %467 = vmatprep.subr.bf16.mxu0 0
    %468 = vmatpush1.bf16.msra.mxu0 %v446
    %469 = vmatprep.subr.bf16.mxu0 0
    %470 = vmatpush1.bf16.msra.mxu0 %v445
    %471 = vmatprep.subr.bf16.mxu0 0
    %472 = vmatpush1.bf16.msra.mxu0 %v444
    %473 = vmatprep.subr.bf16.mxu0 0
    %474 = vmatpush1.bf16.msra.mxu0 %v443
    %475 = vmatprep.subr.bf16.mxu0 0
    %476 = vmatpush2.bf16.msra.mxu0 0
    %477 = vmatprep.subr.bf16.mxu0 0
    %478 = vmatpush2.bf16.msra.mxu0 0
    %479 = vmatprep.subr.bf16.mxu0 0
    %480 = vmatpush2.bf16.msra.mxu0 0
    %481 = vmatprep.subr.bf16.mxu0 0
    %482 = vmatpush2.bf16.msra.mxu0 0
    %483 = vmatprep.subr.bf16.mxu0 0
    %484 = vmatpush2.bf16.msra.mxu0 0
    %485 = vmatprep.subr.bf16.mxu0 0
    %486 = vmatpush2.bf16.msra.mxu0 0
    %487 = vmatprep.subr.bf16.mxu0 0
    %488 = vmatpush2.bf16.msra.mxu0 0
    %489 = vmatprep.subr.bf16.mxu0 0
    %490 = vmatpush2.bf16.msra.mxu0 0
    %491 = vmatprep.mubr.bf16.mxu0 0
    %492 = vmatmul.mubr.bf16.gmra.mxu0 %v404
    %v493 = vpop.f32.mrf.mxu0
    %v494 = vadd.f32 %v409, %v493
    %v495 = vpop.f32.mrf.mxu0
    %v496 = vpop.f32.mrf.mxu0
    %v497 = vpop.f32.mrf.mxu0
    %498 = vdwg.mxu0
    %v499 = vmul.f32 %v494, 0.01
    %v500 = vmax.f32 %v494, %v499
    %v501 = vld [vmem:[%s10] sm:$0xf]
    %v502 = vld [vmem:[%s10 + $0x4] sm:$0xf]
    %v503 = vld [vmem:[%s10 + $0x8] sm:$0xf]
    %v504 = vld [vmem:[%s10 + $0xc] sm:$0xf]
    %v505 = vld [vmem:[%s10 + $0x10] sm:$0xf]
    %v506 = vld [vmem:[%s10 + $0x14] sm:$0xf]
    %v507 = vld [vmem:[%s10 + $0x18] sm:$0xf]
    %v508 = vld [vmem:[%s10 + $0x1c] sm:$0xf]
    %v509 = vld [vmem:[%s10 + $0x20] sm:$0xf]
    %v510 = vld [vmem:[%s10 + $0x24] sm:$0xf]
    %v511 = vld [vmem:[%s10 + $0x28] sm:$0xf]
    %v512 = vld [vmem:[%s10 + $0x2c] sm:$0xf]
    %v513 = vld [vmem:[%s10 + $0x30] sm:$0xf]
    %v514 = vld [vmem:[%s10 + $0x34] sm:$0xf]
    %v515 = vld [vmem:[%s10 + $0x38] sm:$0xf]
    %v516 = vld [vmem:[%s10 + $0x3c] sm:$0xf]
    %v517 = vld [vmem:[%s11] sm:$0x1]
    %v518 = vpack.c.bf16 %v500, %v500
    %v520 = vlaneseq
    %v521 = vshrl.u32 %v520, 7
    %v522 = vsub.s32 0, %v521
    %v523 = vrot.slane %v517, %v522
    %v541 = vunpack.c.l.b16 %v501
    %v542 = vunpack.c.l.b16 %v502
    %v543 = vunpack.c.l.b16 %v503
    %v544 = vunpack.c.l.b16 %v504
    %v545 = vunpack.c.l.b16 %v505
    %v546 = vunpack.c.l.b16 %v506
    %v547 = vunpack.c.l.b16 %v507
    %v548 = vunpack.c.l.b16 %v508
    %v549 = vunpack.c.l.b16 %v509
    %v550 = vunpack.c.l.b16 %v510
    %v551 = vunpack.c.l.b16 %v511
    %v552 = vunpack.c.l.b16 %v512
    %v553 = vunpack.c.l.b16 %v513
    %v554 = vunpack.c.l.b16 %v514
    %v555 = vunpack.c.l.b16 %v515
    %v556 = vunpack.c.l.b16 %v516
    %v557 = vpack.c.b16 %v542, %v541
    %v558 = vpack.c.b16 %v544, %v543
    %v559 = vpack.c.b16 %v546, %v545
    %v560 = vpack.c.b16 %v548, %v547
    %v561 = vpack.c.b16 %v550, %v549
    %v562 = vpack.c.b16 %v552, %v551
    %v563 = vpack.c.b16 %v554, %v553
    %v564 = vpack.c.b16 %v556, %v555
    %573 = vmatprep.subr.bf16.mxu0 0
    %574 = vmatpush1.bf16.msra.mxu0 %v564
    %575 = vmatprep.subr.bf16.mxu0 0
    %576 = vmatpush1.bf16.msra.mxu0 %v563
    %577 = vmatprep.subr.bf16.mxu0 0
    %578 = vmatpush1.bf16.msra.mxu0 %v562
    %579 = vmatprep.subr.bf16.mxu0 0
    %580 = vmatpush1.bf16.msra.mxu0 %v561
    %581 = vmatprep.subr.bf16.mxu0 0
    %582 = vmatpush1.bf16.msra.mxu0 %v560
    %583 = vmatprep.subr.bf16.mxu0 0
    %584 = vmatpush1.bf16.msra.mxu0 %v559
    %585 = vmatprep.subr.bf16.mxu0 0
    %586 = vmatpush1.bf16.msra.mxu0 %v558
    %587 = vmatprep.subr.bf16.mxu0 0
    %588 = vmatpush1.bf16.msra.mxu0 %v557
    %589 = vmatprep.subr.bf16.mxu0 0
    %590 = vmatpush2.bf16.msra.mxu0 0
    %591 = vmatprep.subr.bf16.mxu0 0
    %592 = vmatpush2.bf16.msra.mxu0 0
    %593 = vmatprep.subr.bf16.mxu0 0
    %594 = vmatpush2.bf16.msra.mxu0 0
    %595 = vmatprep.subr.bf16.mxu0 0
    %596 = vmatpush2.bf16.msra.mxu0 0
    %597 = vmatprep.subr.bf16.mxu0 0
    %598 = vmatpush2.bf16.msra.mxu0 0
    %599 = vmatprep.subr.bf16.mxu0 0
    %600 = vmatpush2.bf16.msra.mxu0 0
    %601 = vmatprep.subr.bf16.mxu0 0
    %602 = vmatpush2.bf16.msra.mxu0 0
    %603 = vmatprep.subr.bf16.mxu0 0
    %604 = vmatpush2.bf16.msra.mxu0 0
    %605 = vmatprep.mubr.bf16.mxu0 0
    %606 = vmatmul.mubr.bf16.gmra.mxu0 %v518
    %v607 = vpop.f32.mrf.mxu0
    %v608 = vadd.f32 %v523, %v607
    %v609 = vpop.f32.mrf.mxu0
    %v610 = vpop.f32.mrf.mxu0
    %v611 = vpop.f32.mrf.mxu0
    %612 = vdwg.mxu0
    %v613 = vtanh.pop %v608
    %v614 = vstv %s95
    %v615 = vmul.f32 %v613, %v614
    %vm616 = vcmask 25600
    %617 = vst.msk [vmem:[#allocation11] sm:$0x3] %vm616, %v615
    // Predicated region
    $region66: #{tpu_custom_call.1} parent=1 // pred_check
      _
    $region67: #{tpu_custom_call.1} parent=1 // pred_check_branch
      %619 = sbr.rel (0) target = $region69
    $region68: #{tpu_custom_call.1} parent=1 // pred_region
      %s621 = ssub.s32 32, 32
      %622 = vsyncadd [#allocation5], %s621
      %s624 = sshll.u32 [#allocation11], 4
      %s625 = int_to_ptr.vmem [resolvable:$true] %s624
      %627 = dma.vmem_to_hbm [thread:$0]  %s625, 32, %s12, [#allocation5]
    $region69: #{tpu_custom_call.1} parent=1 // pred_fallthru
      _
    // Predicated region
    $region70: #{tpu_custom_call.1} parent=1 // pred_check
      _
    $region71: #{tpu_custom_call.1} parent=1 // pred_check_branch
      %629 = sbr.rel (0) target = $region73
    $region72: #{tpu_custom_call.1} parent=1 // pred_region
      %630 = dma.done [#allocation5], 32
    $region73: #{tpu_custom_call.1} parent=1 // pred_fallthru
      _
    %631 = vsyncpa [#allocation4], 1
    %632 = vsyncpa [#allocation7], 1
    %633 = vsyncpa [#allocation10], 1
    %634 = vsyncpa [#allocation5], 1

</llo_original>
